<compile_context>
chip_gen: v6e
topology: v6e:2x2x1
jax: 0.10.0
libtpu: 0.0.40
codegen_flags: <defaults>
</compile_context>

<pallas_src>
import math
import functools

import jax
import jax.numpy as jnp
from jax import lax
from jax.experimental import pallas as pl
from jax.experimental.pallas import tpu as pltpu


_COMPUTE_DTYPE = jnp.bfloat16     # MXU compute dtype (accumulation stays f32)
_APPROX_RECIP = True              # EUP approx reciprocal in softmax epilogue


def _physical_vmem_bytes():
    """Per-core VMEM capacity; conservative 64 MiB fallback (v7x-safe)."""
    try:
        info = pltpu.get_tpu_info()
        v = getattr(info, "vmem_capacity_bytes", None)
        if v:
            return int(v)
    except Exception:
        pass
    return 64 * 1024 * 1024


_PHYS_VMEM = _physical_vmem_bytes()
# Leave headroom for Mosaic internal scratch; 96 MiB on v5e/v6e, 48 MiB on v7x.
_VMEM_LIMIT = min(int(_PHYS_VMEM * 0.75), 112 * 1024 * 1024)

# Matmul tile defaults, sized to the available VMEM generation.
if _VMEM_LIMIT >= 80 * 1024 * 1024:          # v5e / v6e (128 MiB physical)
    _MM_TM, _MM_TN, _MM_TK = 512, 512, 1024
else:                                        # v7x (64 MiB per TensorCore)
    _MM_TM, _MM_TN, _MM_TK = 256, 512, 512


def _pick_tile(dim, pref, align=8):
    """Largest tile <= pref that divides dim, preferring `align`-aligned tiles.

    Never falls back to a huge full extent: a large non-divisible dim gets the
    largest divisor <= pref (correct, just slower), so odd shapes cannot
    silently request multi-hundred-MiB blocks or collapse the pipeline.
    """
    pref = max(1, min(pref, dim))
    for t in range(pref, 0, -1):
        if dim % t == 0 and (t % align == 0 or t == dim):
            return t
    for t in range(pref, 0, -1):
        if dim % t == 0:
            return t
    return dim


# ----------------------------------------------------------------------------
# Tiled matmul kernel (P1 pipelining + P3 accumulator init/finalize)
# ----------------------------------------------------------------------------

def _matmul_kernel(x_ref, w_ref, o_ref, acc_ref):
    @pl.when(pl.program_id(2) == 0)
    def _():
        acc_ref[...] = jnp.zeros_like(acc_ref)

    acc_ref[...] += jnp.dot(
        x_ref[...], w_ref[...], preferred_element_type=jnp.float32
    )

    @pl.when(pl.program_id(2) == pl.num_programs(2) - 1)
    def _():
        o_ref[...] = acc_ref[...].astype(o_ref.dtype)


def pallas_matmul(x, w, *, out_dtype=None, tm=_MM_TM, tn=_MM_TN, tk=_MM_TK):
    """x @ w with grid tiling, double-buffered DMA and f32 accumulation."""
    M, K = x.shape
    K2, N = w.shape
    assert K == K2
    out_dtype = out_dtype or x.dtype
    tm = _pick_tile(M, tm, 8)
    tn = _pick_tile(N, tn, 128)
    tk = _pick_tile(K, tk, 128)
    grid = (M // tm, N // tn, K // tk)

    cost = pl.CostEstimate(
        flops=2 * M * N * K,
        transcendentals=0,
        bytes_accessed=int((M * K + K * N) * x.dtype.itemsize
                           + M * N * jnp.dtype(out_dtype).itemsize),
    )
    return pl.pallas_call(
        _matmul_kernel,
        out_shape=jax.ShapeDtypeStruct((M, N), out_dtype),
        grid=grid,
        in_specs=[
            pl.BlockSpec((tm, tk), lambda i, j, k: (i, k)),
            pl.BlockSpec((tk, tn), lambda i, j, k: (k, j)),
        ],
        out_specs=pl.BlockSpec((tm, tn), lambda i, j, k: (i, j)),
        scratch_shapes=[pltpu.VMEM((tm, tn), jnp.float32)],
        compiler_params=pltpu.CompilerParams(
            dimension_semantics=("parallel", "parallel", "arbitrary"),
            vmem_limit_bytes=_VMEM_LIMIT,
        ),
        cost_estimate=cost,
    )(x, w)


# ----------------------------------------------------------------------------
# Fused projection kernel: one matmul over a pre-fused weight, two outputs.
# Avoids the XLA slice copies of the (M, N1+N2) activation entirely.
# ----------------------------------------------------------------------------

def _fused_proj_kernel(x_ref, w_ref, o1_ref, o2_ref, acc_ref, *, n1):
    @pl.when(pl.program_id(1) == 0)
    def _():
        acc_ref[...] = jnp.zeros_like(acc_ref)

    acc_ref[...] += jnp.dot(
        x_ref[...], w_ref[...], preferred_element_type=jnp.float32
    )

    @pl.when(pl.program_id(1) == pl.num_programs(1) - 1)
    def _():
        acc = acc_ref[...]
        o1_ref[...] = acc[:, :n1].astype(o1_ref.dtype)
        o2_ref[...] = acc[:, n1:].astype(o2_ref.dtype)


def pallas_fused_proj(x, w_fused, n1, *, out_dtype=None, tm=_MM_TM, tk=_MM_TK):
    """x @ [W1 | W2] -> (x @ W1, x @ W2) in one pallas_call (two out_specs)."""
    M, K = x.shape
    K2, N = w_fused.shape
    assert K == K2 and 0 < n1 < N
    n2 = N - n1
    out_dtype = out_dtype or x.dtype
    tm = _pick_tile(M, tm, 8)
    tk = _pick_tile(K, tk, 128)
    grid = (M // tm, K // tk)

    cost = pl.CostEstimate(
        flops=2 * M * N * K,
        transcendentals=0,
        bytes_accessed=int((M * K + K * N + M * N) * x.dtype.itemsize),
    )
    return pl.pallas_call(
        functools.partial(_fused_proj_kernel, n1=n1),
        out_shape=(jax.ShapeDtypeStruct((M, n1), out_dtype),
                   jax.ShapeDtypeStruct((M, n2), out_dtype)),
        grid=grid,
        in_specs=[
            pl.BlockSpec((tm, tk), lambda i, k: (i, k)),
            pl.BlockSpec((tk, N), lambda i, k: (k, 0)),
        ],
        out_specs=[
            pl.BlockSpec((tm, n1), lambda i, k: (i, 0)),
            pl.BlockSpec((tm, n2), lambda i, k: (i, 0)),
        ],
        scratch_shapes=[pltpu.VMEM((tm, N), jnp.float32)],
        compiler_params=pltpu.CompilerParams(
            dimension_semantics=("parallel", "arbitrary"),
            vmem_limit_bytes=_VMEM_LIMIT,
        ),
        cost_estimate=cost,
    )(x, w_fused)


# ----------------------------------------------------------------------------
# Flash-style MLA attention kernel
#   - operates directly on the (B, S, E) projection layout (no transposes)
#   - bf16 Q/K/V blocks straight into the MXU (f32 accumulation)
#   - online softmax over a tiled KV grid axis; single lane-dense (tq,E) store
#   - 1/sqrt(D) already folded into W_q, so the kernel has no per-step scale
# ----------------------------------------------------------------------------

def _mla_attention_kernel(q_ref, k_ref, v_ref, o_ref, m_sc, l_sc, acc_sc,
                          *, num_heads, head_dim, unroll_heads):
    kv_idx = pl.program_id(2)
    last_kv = pl.num_programs(2) - 1

    @pl.when(kv_idx == 0)
    def _():
        m_sc[...] = jnp.full_like(m_sc, -jnp.inf)
        l_sc[...] = jnp.zeros_like(l_sc)
        acc_sc[...] = jnp.zeros_like(acc_sc)

    D = head_dim

    def process_head(h, col):
        # Per-head bf16 slices straight off the VMEM refs (no f32 upcast).
        qh = q_ref[0, :, col]                       # (tq,  D) bf16 (pre-scaled)
        kh = k_ref[0, :, col]                       # (tkv, D) bf16
        vh = v_ref[0, :, col]                       # (tkv, D) bf16
        # Q K^T on the MXU without materializing K^T; f32 accumulation.
        s = lax.dot_general(qh, kh, (((1,), (1,)), ((), ())),
                            preferred_element_type=jnp.float32)  # (tq, tkv)
        m_prev = m_sc[h]                                          # (tq, 1)
        m_new = jnp.maximum(m_prev, jnp.max(s, axis=-1, keepdims=True))
        alpha = jnp.exp(m_prev - m_new)
        p = jnp.exp(s - m_new)                                    # f32
        l_sc[h] = alpha * l_sc[h] + jnp.sum(p, axis=-1, keepdims=True)
        pv = jnp.dot(p.astype(vh.dtype), vh,                      # bf16 PV dot
                     preferred_element_type=jnp.float32)          # (tq, D)
        acc_sc[:, col] = alpha * acc_sc[:, col] + pv
        m_sc[h] = m_new

    def finalize_head(h, col):
        inv = pl.reciprocal(l_sc[h], approx=_APPROX_RECIP)        # EUP slot
        acc_sc[:, col] = acc_sc[:, col] * inv

    if unroll_heads:
        # Small / lane-unaligned head dims: static unroll, static slices.
        for h in range(num_heads):
            process_head(h, slice(h * D, (h + 1) * D))

        @pl.when(kv_idx == last_kv)
        def _():
            for h in range(num_heads):
                finalize_head(h, slice(h * D, (h + 1) * D))
            o_ref[0] = acc_sc[...].astype(o_ref.dtype)            # one (tq,E) store
    else:
        # Realistic head counts: fori_loop bounds live ranges (no vreg spill),
        # D is a multiple of 128 so lane slices stay vreg-aligned.
        def body(h, carry):
            process_head(h, pl.ds(pl.multiple_of(h * D, D), D))
            return carry

        lax.fori_loop(0, num_heads, body, 0)

        @pl.when(kv_idx == last_kv)
        def _():
            def fbody(h, carry):
                finalize_head(h, pl.ds(pl.multiple_of(h * D, D), D))
                return carry

            lax.fori_loop(0, num_heads, fbody, 0)
            o_ref[0] = acc_sc[...].astype(o_ref.dtype)            # one (tq,E) store


def _attn_tiles(S, E, num_heads, itemsize, budget):
    """Pick (tq, tkv) so the double-buffered blocks + scratch fit the budget."""
    for tq_pref, tkv_pref in ((512, 1024), (256, 512), (256, 256), (128, 256),
                              (128, 128), (64, 128), (32, 64), (8, 8)):
        tq = _pick_tile(S, tq_pref, 8)
        tkv = _pick_tile(S, tkv_pref, 8)
        use = ((2 * tq * E + 4 * tkv * E + 2 * tq * E) * itemsize   # q, k+v, o (x2 bufs)
               + tq * E * 4                                          # f32 acc
               + 2 * num_heads * tq * 128 * 4)                       # m, l (lane-padded)
        if use <= 0.9 * budget:
            return tq, tkv
    return _pick_tile(S, 8, 8), _pick_tile(S, 8, 8)


def pallas_mla_attention(q, k, v, num_heads):
    """q, k, v: (B, S, E) with head h in columns [h*D,(h+1)*D). Returns (B, S, E)."""
    B, S, E = q.shape
    assert E % num_heads == 0
    D = E // num_heads
    tq, tkv = _attn_tiles(S, E, num_heads, q.dtype.itemsize, _VMEM_LIMIT)
    grid = (B, S // tq, S // tkv)

    # fori over heads only when per-head column slices stay 128-lane aligned.
    unroll_heads = (D % 128 != 0) or (num_heads <= 4)

    qo_spec = pl.BlockSpec((1, tq, E), lambda b, qi, ki: (b, qi, 0))
    kv_spec = pl.BlockSpec((1, tkv, E), lambda b, qi, ki: (b, ki, 0))

    cost = pl.CostEstimate(
        flops=4 * B * S * S * E,                     # QK^T + PV over all heads
        transcendentals=B * num_heads * S * S,       # exp
        bytes_accessed=int(4 * B * S * E * q.dtype.itemsize),
    )
    return pl.pallas_call(
        functools.partial(_mla_attention_kernel, num_heads=num_heads,
                          head_dim=D, unroll_heads=unroll_heads),
        out_shape=jax.ShapeDtypeStruct((B, S, E), q.dtype),
        grid=grid,
        in_specs=[qo_spec, kv_spec, kv_spec],
        out_specs=qo_spec,
        scratch_shapes=[
            pltpu.VMEM((num_heads, tq, 1), jnp.float32),   # running max m
            pltpu.VMEM((num_heads, tq, 1), jnp.float32),   # running denom l
            pltpu.VMEM((tq, E), jnp.float32),              # lane-dense accumulator
        ],
        compiler_params=pltpu.CompilerParams(
            dimension_semantics=("parallel", "parallel", "arbitrary"),
            vmem_limit_bytes=_VMEM_LIMIT,
        ),
        cost_estimate=cost,
    )(q, k, v)


# ----------------------------------------------------------------------------
# MLA forward (glue in plain JAX, compute in Pallas)
# ----------------------------------------------------------------------------

def init_mla_params(key, embed_dim, num_heads, latent_dim, dtype=jnp.float32):
    """Parameter init. Raw f32 weights kept for the reference; pre-fused,
    pre-scaled bf16 weights stored for the Pallas path (zero per-step cost)."""
    ks = jax.random.split(key, 5)

    def w(k, fan_in, fan_out):
        bound = 1.0 / math.sqrt(fan_in)
        return jax.random.uniform(k, (fan_in, fan_out), dtype, -bound, bound)

    raw = {
        "W_q": w(ks[0], embed_dim, embed_dim),
        "W_c": w(ks[1], embed_dim, latent_dim),
        "W_k": w(ks[2], latent_dim, embed_dim),
        "W_v": w(ks[3], latent_dim, embed_dim),
        "W_o": w(ks[4], embed_dim, embed_dim),
    }
    scale = 1.0 / math.sqrt(embed_dim // num_heads)
    return {
        # 1/sqrt(D) folded into the W_q columns of the fused weight.
        "W_qc": jnp.concatenate([raw["W_q"] * scale, raw["W_c"]],
                                axis=1).astype(_COMPUTE_DTYPE),      # (E, E+L)
        "W_kv": jnp.concatenate([raw["W_k"], raw["W_v"]],
                                axis=1).astype(_COMPUTE_DTYPE),      # (L, 2E)
        "W_o": raw["W_o"].astype(_COMPUTE_DTYPE),                    # (E, E)
        "ref": raw,
    }


def mla_forward(params, x, num_heads):
    B, S, E = x.shape
    x2 = x.reshape(B * S, E).astype(_COMPUTE_DTYPE)

    # Fused projections, two outputs per pallas_call (no activation slices).
    q2, c = pallas_fused_proj(x2, params["W_qc"], n1=E)      # (B*S,E), (B*S,L)
    k2, v2 = pallas_fused_proj(c, params["W_kv"], n1=E)      # (B*S,E), (B*S,E)

    # (B, S, E) layout with head h in columns [h*D,(h+1)*D) == the PyTorch
    # view(B,S,H,D).transpose(1,2) semantics, so no XLA transposes are needed.
    q = q2.reshape(B, S, E)
    k = k2.reshape(B, S, E)
    v = v2.reshape(B, S, E)

    attn = pallas_mla_attention(q, k, v, num_heads)          # (B, S, E) bf16

    out = pallas_matmul(attn.reshape(B * S, E), params["W_o"],
                        out_dtype=jnp.float32)               # (B*S, E) f32
    return out.reshape(B, S, E)


def mla_reference(params, x, num_heads):
    """Pure-JAX f32 reference mirroring the PyTorch forward (attn_mask=None)."""
    p = params["ref"]
    B, S, E = x.shape
    D = E // num_heads
    q = (x @ p["W_q"]).reshape(B, S, num_heads, D).transpose(0, 2, 1, 3)
    c = x @ p["W_c"]
    k = (c @ p["W_k"]).reshape(B, S, num_heads, D).transpose(0, 2, 1, 3)
    v = (c @ p["W_v"]).reshape(B, S, num_heads, D).transpose(0, 2, 1, 3)
    scores = jnp.einsum("bhqd,bhkd->bhqk", q, k) / math.sqrt(D)
    probs = jax.nn.softmax(scores, axis=-1)
    attn = jnp.einsum("bhqk,bhkd->bhqd", probs, v)
    attn = attn.transpose(0, 2, 1, 3).reshape(B, S, E)
    return attn @ p["W_o"]


if __name__ == "__main__":
    # Small, module-consistent shapes.
    batch, seq, embed_dim, num_heads, latent_dim = 2, 8, 32, 4, 16

    key = jax.random.PRNGKey(0)
    k_x, k_p = jax.random.split(key)
    x = jax.random.normal(k_x, (batch, seq, embed_dim), jnp.float32)
    params = init_mla_params(k_p, embed_dim, num_heads, latent_dim)

    out = mla_forward(params, x, num_heads)
    out = jax.block_until_ready(out)

    ref = mla_reference(params, x, num_heads)
    assert out.shape == (batch, seq, embed_dim)
    assert out.dtype == jnp.float32
    # bf16 MXU compute with f32 accumulation -> relaxed parity vs f32 reference.
    assert jnp.allclose(out, ref, atol=3e-2, rtol=3e-2), "mismatch vs reference"

    print("KERNEL_OK")
</pallas_src>

<mosaic_0001>
module attributes {stable_mosaic.version = 11 : i64} {
  func.func @_fused_proj_kernel(%arg0: i32, %arg1: i32, %arg2: memref<16x32xbf16, #tpu.memory_space<vmem>>, %arg3: memref<32x48xbf16, #tpu.memory_space<vmem>>, %arg4: memref<16x32xbf16, #tpu.memory_space<vmem>>, %arg5: memref<16x16xbf16, #tpu.memory_space<vmem>>, %arg6: memref<16x48xf32, #tpu.memory_space<vmem>>) attributes {dimension_semantics = [#tpu.dimension_semantics<parallel>, #tpu.dimension_semantics<arbitrary>], iteration_bounds = array<i64: 1, 1>, scalar_prefetch = 0 : i64, scratch_operands = 1 : i64, tpu.core_type = #tpu.core_type<tc>, window_params = [{transform_indices = @transform_0, window_bounds = array<i64: 16, 32>}, {transform_indices = @transform_1, window_bounds = array<i64: 32, 48>}, {transform_indices = @transform_2, window_bounds = array<i64: 16, 32>}, {transform_indices = @transform_3, window_bounds = array<i64: 16, 16>}]} {
    %c0_i32 = arith.constant 0 : i32
    %0 = arith.cmpi eq, %arg1, %c0_i32 : i32
    %1 = arith.extui %0 : i1 to i32
    %c0_i32_0 = arith.constant 0 : i32
    %2 = arith.cmpi ne, %1, %c0_i32_0 : i32
    scf.if %2 {
      %cst_10 = arith.constant 0.000000e+00 : f32
      %12 = vector.broadcast %cst_10 : f32 to vector<16x48xf32>
      %c0_11 = arith.constant 0 : index
      %c0_12 = arith.constant 0 : index
      %13 = vector.load %arg6[%c0_11, %c0_12] : memref<16x48xf32, #tpu.memory_space<vmem>>, vector<16x48xf32>
      tpu.vector_store %arg6[%c0_11, %c0_12], %12 {strides = array<i32>} : memref<16x48xf32, #tpu.memory_space<vmem>>, vector<16x48xf32>,
    } else {
    }
    %c0 = arith.constant 0 : index
    %c0_1 = arith.constant 0 : index
    %3 = vector.load %arg6[%c0, %c0_1] : memref<16x48xf32, #tpu.memory_space<vmem>>, vector<16x48xf32>
    %c0_2 = arith.constant 0 : index
    %c0_3 = arith.constant 0 : index
    %4 = vector.load %arg2[%c0_2, %c0_3] : memref<16x32xbf16, #tpu.memory_space<vmem>>, vector<16x32xbf16>
    %c0_4 = arith.constant 0 : index
    %c0_5 = arith.constant 0 : index
    %5 = vector.load %arg3[%c0_4, %c0_5] : memref<32x48xbf16, #tpu.memory_space<vmem>>, vector<32x48xbf16>
    %cst = arith.constant dense<0.000000e+00> : vector<16x48xf32>
    %6 = tpu.matmul %4, %5, %cst {dimension_numbers = #tpu.dot_dimension_numbers<[1], [0], [0], [1], [0, 0, 1, 1], [], []>} : vector<16x32xbf16>, vector<32x48xbf16>, vector<16x48xf32> -> vector<16x48xf32>
    %7 = arith.addf %3, %6 : vector<16x48xf32>
    %c0_6 = arith.constant 0 : index
    %c0_7 = arith.constant 0 : index
    %8 = vector.load %arg6[%c0_6, %c0_7] : memref<16x48xf32, #tpu.memory_space<vmem>>, vector<16x48xf32>
    tpu.vector_store %arg6[%c0_6, %c0_7], %7 {strides = array<i32>} : memref<16x48xf32, #tpu.memory_space<vmem>>, vector<16x48xf32>,
    %c0_i32_8 = arith.constant 0 : i32
    %9 = arith.cmpi eq, %arg1, %c0_i32_8 : i32
    %10 = arith.extui %9 : i1 to i32
    %c0_i32_9 = arith.constant 0 : i32
    %11 = arith.cmpi ne, %10, %c0_i32_9 : i32
    scf.if %11 {
      %c0_10 = arith.constant 0 : index
      %c0_11 = arith.constant 0 : index
      %12 = vector.load %arg6[%c0_10, %c0_11] : memref<16x48xf32, #tpu.memory_space<vmem>>, vector<16x48xf32>
      %13 = vector.extract_strided_slice %12 {offsets = [0, 0], sizes = [16, 32], strides = [1, 1]} : vector<16x48xf32> to vector<16x32xf32>
      %14 = arith.truncf %13 : vector<16x32xf32> to vector<16x32xbf16>
      %c0_12 = arith.constant 0 : index
      %c0_13 = arith.constant 0 : index
      %15 = vector.load %arg4[%c0_12, %c0_13] : memref<16x32xbf16, #tpu.memory_space<vmem>>, vector<16x32xbf16>
      tpu.vector_store %arg4[%c0_12, %c0_13], %14 {strides = array<i32>} : memref<16x32xbf16, #tpu.memory_space<vmem>>, vector<16x32xbf16>,
      %16 = vector.extract_strided_slice %12 {offsets = [0, 32], sizes = [16, 16], strides = [1, 1]} : vector<16x48xf32> to vector<16x16xf32>
      %17 = arith.truncf %16 : vector<16x16xf32> to vector<16x16xbf16>
      %c0_14 = arith.constant 0 : index
      %c0_15 = arith.constant 0 : index
      %18 = vector.load %arg5[%c0_14, %c0_15] : memref<16x16xbf16, #tpu.memory_space<vmem>>, vector<16x16xbf16>
      tpu.vector_store %arg5[%c0_14, %c0_15], %17 {strides = array<i32>} : memref<16x16xbf16, #tpu.memory_space<vmem>>, vector<16x16xbf16>,
    } else {
    }
    return
  }
  func.func @transform_0(%arg0: i32, %arg1: i32) -> (i32, i32) {
    %c0_i32 = arith.constant 0 : i32
    return %arg0, %arg1 : i32, i32
  }
  func.func @transform_1(%arg0: i32, %arg1: i32) -> (i32, i32) {
    %c0_i32 = arith.constant 0 : i32
    %c0_i32_0 = arith.constant 0 : i32
    return %arg1, %c0_i32 : i32, i32
  }
  func.func @transform_2(%arg0: i32, %arg1: i32) -> (i32, i32) {
    %c0_i32 = arith.constant 0 : i32
    %c0_i32_0 = arith.constant 0 : i32
    return %arg0, %c0_i32 : i32, i32
  }
  func.func @transform_3(%arg0: i32, %arg1: i32) -> (i32, i32) {
    %c0_i32 = arith.constant 0 : i32
    %c0_i32_0 = arith.constant 0 : i32
    return %arg0, %c0_i32 : i32, i32
  }
}

</mosaic_0001>

<llo_original>
// kernel: tpu_custom_call.1
$region0: #{tpu_custom_call.1}
  #allocation0 [shape = 'u32[]', space=smem, size = 0x4, offset = 0x4, fixed_abs, tag = 'smem constant byte address 0x4 - core index']
  #allocation1 [shape = 'u32[144,128]{1,0:T(1,128)}', space=vmem, size = 0x12000, scoped, tag = 'internal scratch']
  #allocation2 [shape = 'f32[16,48]{1,0:T(8,128)}', space=vmem, size = 0x2000, scoped, tag = 'scratch operand']
  %s0 = inlined_call_operand.hbm [shape: bf16[16,32], index: 0, kind: input, shape index: {}]
  %s1 = inlined_call_operand.hbm [shape: bf16[32,48], index: 1, kind: input, shape index: {}]
  %s2 = inlined_call_operand.hbm [shape: bf16[16,32], index: 2, kind: output, shape index: {0}]
  %s3 = inlined_call_operand.hbm [shape: bf16[16,16], index: 3, kind: output, shape index: {1}]
  %4 = xla_tuple %s2, %s3
  %s5 = sld [smem:[#allocation0]]
  $region42: #{tpu_custom_call.1} parent=0
    _
  %s7 = ssub.s32 1, %s5
  %s8 = scalar_select 0, %s7, %s5
  $region1: #{tpu_custom_call.1} parent=0
    #allocation3 [shape = 'u8[4096]{0}', space=vmem, size = 0x1000, scoped, tag = 'input window, operand 0, single buffered']
    #allocation4 [shape = 's32[1]{0}', space=sflag, size = 0x4, scoped, tag = 'scoped memory for tpu_custom_call.1']
    #allocation5 [shape = 's32[1]{0}', space=sflag, size = 0x4, scoped, tag = 'scoped memory for tpu_custom_call.1']
    #allocation6 [shape = 'u8[8192]{0}', space=vmem, size = 0x2000, scoped, tag = 'input window, operand 1, single buffered']
    #allocation7 [shape = 's32[1]{0}', space=sflag, size = 0x4, scoped, tag = 'scoped memory for tpu_custom_call.1']
    #allocation8 [shape = 'u8[4096]{0}', space=vmem, size = 0x1000, scoped, tag = 'output window, operand 0, single buffered']
    #allocation9 [shape = 'u8[4096]{0}', space=vmem, size = 0x1000, scoped, tag = 'output window, operand 1, single buffered']
    #allocation10 [shape = 's32[1]{0}', space=sflag, size = 0x4, scoped, tag = 'scoped memory for tpu_custom_call.1']
    %9 = vsyncpa [#allocation4], 0
    %10 = vsyncpa [#allocation7], 0
    %11 = vsyncpa [#allocation5], 0
    %12 = vsyncpa [#allocation10], 0
    // Predicated region
    $region2: #{tpu_custom_call.1} parent=1 // pred_check
      _
    $region3: #{tpu_custom_call.1} parent=1 // pred_check_branch
      %14 = sbr.rel (0) target = $region5
    $region4: #{tpu_custom_call.1} parent=1 // pred_region
      %s16 = ssub.s32 128, 128
      %17 = vsyncadd [#allocation4], %s16
      %s18 = sshll.u32 [#allocation3], 4
      %s19 = int_to_ptr.vmem [resolvable:$true] %s18
      %24 = dma.hbm_to_vmem [thread:$0]  %s0, 128, %s19, [#allocation4], 64, 64, 4
    $region5: #{tpu_custom_call.1} parent=1 // pred_fallthru
      _
    // Predicated region
    $region6: #{tpu_custom_call.1} parent=1 // pred_check
      _
    $region7: #{tpu_custom_call.1} parent=1 // pred_check_branch
      %26 = sbr.rel (0) target = $region9
    $region8: #{tpu_custom_call.1} parent=1 // pred_region
      %s28 = ssub.s32 256, 256
      %29 = vsyncadd [#allocation7], %s28
      %s30 = sshll.u32 [#allocation6], 4
      %s31 = int_to_ptr.vmem [resolvable:$true] %s30
      %36 = dma.hbm_to_vmem [thread:$0]  %s1, 256, %s31, [#allocation7], 64, 64, 4
    $region9: #{tpu_custom_call.1} parent=1 // pred_fallthru
      _
    // Predicated region
    $region10: #{tpu_custom_call.1} parent=1 // pred_check
      _
    $region11: #{tpu_custom_call.1} parent=1 // pred_check_branch
      %38 = sbr.rel (0) target = $region13
    $region12: #{tpu_custom_call.1} parent=1 // pred_region
      %39 = dma.done [#allocation4], 128
    $region13: #{tpu_custom_call.1} parent=1 // pred_fallthru
      _
    // Predicated region
    $region14: #{tpu_custom_call.1} parent=1 // pred_check
      _
    $region15: #{tpu_custom_call.1} parent=1 // pred_check_branch
      %41 = sbr.rel (0) target = $region17
    $region16: #{tpu_custom_call.1} parent=1 // pred_region
      %42 = dma.done [#allocation7], 256
    $region17: #{tpu_custom_call.1} parent=1 // pred_fallthru
      _
    %p44 = scmp.eq.s32.totalorder 0, 0
    // Predicated region
    $region18: #{tpu_custom_call.1} parent=1 // pred_check
      %p45 = pneg %p44
    $region19: #{tpu_custom_call.1} parent=1 // pred_check_branch
      %47 = sbr.rel (%p45) target = $region21
    $region20: #{tpu_custom_call.1} parent=1 // pred_region
      %vm48 = vcmask 392192
      %49 = vst.msk [vmem:[#allocation2] sm:$0xff] %vm48, 0.0
      %50 = vst.msk [vmem:[#allocation2 + $0x8] sm:$0xff] %vm48, 0.0
    $region21: #{tpu_custom_call.1} parent=1 // pred_fallthru
      _
    %v51 = vld [vmem:[#allocation2] sm:$0xff]
    %v52 = vld [vmem:[#allocation2 + $0x8] sm:$0xff]
    %v53 = vld [vmem:[#allocation3] sm:$0xf]
    %v54 = vld [vmem:[#allocation3 + $0x4] sm:$0xf]
    %v55 = vld [vmem:[#allocation6] sm:$0xf]
    %v56 = vld [vmem:[#allocation6 + $0x4] sm:$0xf]
    %v57 = vld [vmem:[#allocation6 + $0x8] sm:$0xf]
    %v58 = vld [vmem:[#allocation6 + $0xc] sm:$0xf]
    %v61 = vunpack.c.l.b16 %v53
    %v62 = vunpack.c.l.b16 %v54
    %v63 = vpack.c.b16 %v62, %v61
    %v68 = vunpack.c.l.b16 %v55
    %v69 = vunpack.c.l.b16 %v56
    %v70 = vunpack.c.l.b16 %v57
    %v71 = vunpack.c.l.b16 %v58
    %v72 = vpack.c.b16 %v69, %v68
    %v73 = vpack.c.b16 %v71, %v70
    %vm76 = vcmask 261120
    %v78 = vsel %vm76, %v63, 0
    %80 = vmatprep.subr.bf16.mxu0 0
    %81 = vmatpush1.bf16.msra.mxu0 0
    %82 = vmatprep.subr.bf16.mxu0 0
    %83 = vmatpush1.bf16.msra.mxu0 0
    %84 = vmatprep.subr.bf16.mxu0 0
    %85 = vmatpush1.bf16.msra.mxu0 0
    %86 = vmatprep.subr.bf16.mxu0 0
    %87 = vmatpush1.bf16.msra.mxu0 0
    %88 = vmatprep.subr.bf16.mxu0 0
    %89 = vmatpush1.bf16.msra.mxu0 0
    %90 = vmatprep.subr.bf16.mxu0 0
    %91 = vmatpush1.bf16.msra.mxu0 0
    %92 = vmatprep.subr.bf16.mxu0 0
    %93 = vmatpush1.bf16.msra.mxu0 %v73
    %94 = vmatprep.subr.bf16.mxu0 0
    %95 = vmatpush1.bf16.msra.mxu0 %v72
    %96 = vmatprep.subr.bf16.mxu0 0
    %97 = vmatpush2.bf16.msra.mxu0 0
    %98 = vmatprep.subr.bf16.mxu0 0
    %99 = vmatpush2.bf16.msra.mxu0 0
    %100 = vmatprep.subr.bf16.mxu0 0
    %101 = vmatpush2.bf16.msra.mxu0 0
    %102 = vmatprep.subr.bf16.mxu0 0
    %103 = vmatpush2.bf16.msra.mxu0 0
    %104 = vmatprep.subr.bf16.mxu0 0
    %105 = vmatpush2.bf16.msra.mxu0 0
    %106 = vmatprep.subr.bf16.mxu0 0
    %107 = vmatpush2.bf16.msra.mxu0 0
    %108 = vmatprep.subr.bf16.mxu0 0
    %109 = vmatpush2.bf16.msra.mxu0 0
    %110 = vmatprep.subr.bf16.mxu0 0
    %111 = vmatpush2.bf16.msra.mxu0 0
    %112 = vmatprep.mubr.bf16.mxu0 0
    %113 = vmatmul.mubr.bf16.gmra.mxu0 %v78
    %v114 = vpop.f32.mrf.mxu0
    %v115 = vadd.f32 0.0, %v114
    %v116 = vpop.f32.mrf.mxu0
    %v117 = vpop.f32.mrf.mxu0
    %v118 = vadd.f32 0.0, %v117
    %v119 = vpop.f32.mrf.mxu0
    %120 = vdwg.mxu0
    %v121 = vadd.f32 %v51, %v115
    %v122 = vadd.f32 %v52, %v118
    %vm123 = vcmask 392192
    %124 = vst.msk [vmem:[#allocation2] sm:$0xff] %vm123, %v121
    %125 = vst.msk [vmem:[#allocation2 + $0x8] sm:$0xff] %vm123, %v122
    // Predicated region
    $region22: #{tpu_custom_call.1} parent=1 // pred_check
      %p126 = pneg %p44
    $region23: #{tpu_custom_call.1} parent=1 // pred_check_branch
      %128 = sbr.rel (%p126) target = $region25
    $region24: #{tpu_custom_call.1} parent=1 // pred_region
      %v129 = vld [vmem:[#allocation2] sm:$0xff]
      %v130 = vld [vmem:[#allocation2 + $0x8] sm:$0xff]
      %v131 = vpack.c.bf16 %v130, %v129
      %v133 = vunpack.c.l.b16 %v131
      %v134 = vunpack.c.h.b16 %v131
      %v135 = vpack.c.b16 %v133, %v133
      %v136 = vpack.c.b16 %v134, %v134
      %vm139 = vcmask 257024
      %140 = vst.msk [vmem:[#allocation8] sm:$0xf] %vm139, %v135
      %141 = vst.msk [vmem:[#allocation8 + $0x4] sm:$0xf] %vm139, %v136
      %142 = vrot.lane.b32.xlu0 %v135, 96
      %v143 = vpop.permute.xlu0 %142
      %144 = vrot.lane.b32.xlu0 %v136, 96
      %v145 = vpop.permute.xlu0 %144
      %vm148 = vcmask 125952
      %149 = vst.msk [vmem:[#allocation9] sm:$0xf] %vm148, %v143
      %150 = vst.msk [vmem:[#allocation9 + $0x4] sm:$0xf] %vm148, %v145
    $region25: #{tpu_custom_call.1} parent=1 // pred_fallthru
      _
    // Predicated region
    $region26: #{tpu_custom_call.1} parent=1 // pred_check
      _
    $region27: #{tpu_custom_call.1} parent=1 // pred_check_branch
      %152 = sbr.rel (0) target = $region29
    $region28: #{tpu_custom_call.1} parent=1 // pred_region
      %s154 = ssub.s32 128, 128
      %155 = vsyncadd [#allocation5], %s154
      %s156 = sshll.u32 [#allocation8], 4
      %s157 = int_to_ptr.vmem [resolvable:$true] %s156
      %162 = dma.vmem_to_hbm [thread:$0]  %s157, 128, %s2, [#allocation5], 64, 64, 4
    $region29: #{tpu_custom_call.1} parent=1 // pred_fallthru
      _
    // Predicated region
    $region30: #{tpu_custom_call.1} parent=1 // pred_check
      _
    $region31: #{tpu_custom_call.1} parent=1 // pred_check_branch
      %164 = sbr.rel (0) target = $region33
    $region32: #{tpu_custom_call.1} parent=1 // pred_region
      %s166 = ssub.s32 128, 128
      %167 = vsyncadd [#allocation10], %s166
      %s168 = sshll.u32 [#allocation9], 4
      %s169 = int_to_ptr.vmem [resolvable:$true] %s168
      %174 = dma.vmem_to_hbm [thread:$0]  %s169, 128, %s3, [#allocation10], 64, 64, 4
    $region33: #{tpu_custom_call.1} parent=1 // pred_fallthru
      _
    // Predicated region
    $region34: #{tpu_custom_call.1} parent=1 // pred_check
      _
    $region35: #{tpu_custom_call.1} parent=1 // pred_check_branch
      %176 = sbr.rel (0) target = $region37
    $region36: #{tpu_custom_call.1} parent=1 // pred_region
      %177 = dma.done [#allocation5], 128
    $region37: #{tpu_custom_call.1} parent=1 // pred_fallthru
      _
    // Predicated region
    $region38: #{tpu_custom_call.1} parent=1 // pred_check
      _
    $region39: #{tpu_custom_call.1} parent=1 // pred_check_branch
      %179 = sbr.rel (0) target = $region41
    $region40: #{tpu_custom_call.1} parent=1 // pred_region
      %180 = dma.done [#allocation10], 128
    $region41: #{tpu_custom_call.1} parent=1 // pred_fallthru
      _
    %181 = vsyncpa [#allocation4], 1
    %182 = vsyncpa [#allocation7], 1
    %183 = vsyncpa [#allocation5], 1
    %184 = vsyncpa [#allocation10], 1

</llo_original>
